<compile_context>
chip_gen: v7x
topology: tpu7x:2x2x1
jax: 0.10.0
libtpu: 0.0.40
codegen_flags: <defaults>
</compile_context>

<pallas_src>
import functools

import jax
import jax.numpy as jnp
from jax import lax
from jax.experimental import pallas as pl
from jax.experimental.pallas import tpu as pltpu


# --------------------------------------------------------------------------- #
# Generation-aware VMEM budget
# --------------------------------------------------------------------------- #
def _vmem_budget_bytes():
    """Scoped-VMEM budget with headroom; safe default assumes v7x (64 MiB/TC)."""
    phys = 64 * 1024 * 1024
    try:
        info = pltpu.get_tpu_info()
        phys = int(getattr(info, "vmem_capacity_bytes", phys))
    except Exception:
        pass
    # Leave headroom for Mosaic internal scratch / semaphores; cap at 100 MiB.
    return int(min(phys - 16 * 1024 * 1024, 100 * 1024 * 1024))


# --------------------------------------------------------------------------- #
# k-tap zero-padded channel conv + sigmoid (channels on sublanes)
# --------------------------------------------------------------------------- #
def _channel_conv_sigmoid(w_ref, y, k):
    """y: (C, 1) f32 pooled means. w_ref: (k,) SMEM taps. Returns (C, 1) f32.

    conv[c] = sum_j w[j] * y[c + j - pad]  (zero padded), i.e. PyTorch Conv1d
    cross-correlation.  Channel shifts are sublane shifts -> pltpu.roll + mask.
    """
    c = y.shape[0]
    pad = (k - 1) // 2
    row = lax.broadcasted_iota(jnp.int32, y.shape, 0)
    conv = jnp.zeros_like(y)
    for j in range(k):
        off = j - pad                       # tap j multiplies y[c + off]
        if abs(off) >= c:
            continue
        if off == 0:
            term = y
        else:
            rolled = pltpu.roll(y, shift=(-off) % c, axis=0)
            if off > 0:
                term = jnp.where(row < c - off, rolled, 0.0)
            else:
                term = jnp.where(row >= -off, rolled, 0.0)
        conv = conv + w_ref[j] * term
    return jax.nn.sigmoid(conv)


# --------------------------------------------------------------------------- #
# Fused single-pass kernel: pool + conv + sigmoid + scale on a resident slab
# --------------------------------------------------------------------------- #
def _fused_kernel(w_ref, x_ref, o_ref, *, inv_hw, k):
    y = jnp.sum(x_ref[...].astype(jnp.float32), axis=1, keepdims=True) * inv_hw
    att = _channel_conv_sigmoid(w_ref, y, k)            # (C, 1) f32
    x = x_ref[...]                                      # same VMEM block
    o_ref[...] = (x * att.astype(x.dtype)).astype(o_ref.dtype)


# --------------------------------------------------------------------------- #
# Fallback pass 1: spatially-tiled pool, conv+sigmoid folded into the finalize
# --------------------------------------------------------------------------- #
def _pool_att_kernel(w_ref, x_ref, att_ref, *, inv_hw, tail, k):
    t = pl.program_id(1)
    last = pl.num_programs(1) - 1

    @pl.when(t == 0)
    def _():
        att_ref[...] = jnp.zeros_like(att_ref)

    if tail == 0:
        # HW divides the tile: no masking anywhere.
        att_ref[...] += jnp.sum(x_ref[...].astype(jnp.float32), axis=1,
                                keepdims=True)
    else:
        # Mask only the ragged last tile; full tiles accumulate unmasked.
        @pl.when(t != last)
        def _():
            att_ref[...] += jnp.sum(x_ref[...].astype(jnp.float32), axis=1,
                                    keepdims=True)

        @pl.when(t == last)
        def _():
            x = x_ref[...]
            lane = lax.broadcasted_iota(jnp.int32, x.shape, 1)
            xf = jnp.where(lane < tail, x.astype(jnp.float32), 0.0)
            att_ref[...] += jnp.sum(xf, axis=1, keepdims=True)

    @pl.when(t == last)
    def _():
        y = att_ref[...] * inv_hw
        att_ref[...] = _channel_conv_sigmoid(w_ref, y, k)


# --------------------------------------------------------------------------- #
# Fallback pass 2: out = x * att (broadcast over the spatial lanes)
# --------------------------------------------------------------------------- #
def _scale_kernel(att_ref, x_ref, o_ref):
    x = x_ref[...]                                      # (C, T)
    o_ref[...] = (x * att_ref[...].astype(x.dtype)).astype(o_ref.dtype)


# --------------------------------------------------------------------------- #
# Tiling helper
# --------------------------------------------------------------------------- #
def _pick_hw_tile(hw, budget_bytes, bytes_per_lane):
    """Largest lane-dense (multiple-of-128) spatial tile within the budget."""
    max_tile = budget_bytes // max(1, bytes_per_lane)
    if hw <= max_tile:
        return int(hw)                      # single block covers full extent
    return int(max(128, (max_tile // 128) * 128))


# --------------------------------------------------------------------------- #
# Wrapper
# --------------------------------------------------------------------------- #
def eca_forward(x, conv_weight, *, tile_budget_bytes=None):
    """x: (B, C, H, W); conv_weight: Conv1d(1,1,k,bias=False) taps (any shape)."""
    b, c, h, w = x.shape
    hw = h * w
    w_taps = jnp.asarray(conv_weight, jnp.float32).reshape(-1)
    k = int(w_taps.shape[0])
    assert k % 2 == 1, "ECA kernel size must be odd (padding=(k-1)//2)"

    itemsize = jnp.dtype(x.dtype).itemsize
    x2 = x.reshape(b, c, hw)
    inv_hw = float(1.0 / hw)

    vmem_limit = _vmem_budget_bytes()
    budget = vmem_limit if tile_budget_bytes is None else int(tile_budget_bytes)

    # ---------------- fused single-pass path (1 read + 1 write) -------------
    slab_bytes = c * hw * itemsize
    # double-buffered in+out blocks plus two f32 slab-sized temporaries
    fused_need = 4 * slab_bytes + 2 * c * hw * 4
    if fused_need <= budget:
        out = pl.pallas_call(
            functools.partial(_fused_kernel, inv_hw=inv_hw, k=k),
            out_shape=jax.ShapeDtypeStruct((b, c, hw), x.dtype),
            grid_spec=pltpu.PrefetchScalarGridSpec(
                num_scalar_prefetch=0,
                grid=(b,),
                in_specs=[
                    pl.BlockSpec(memory_space=pltpu.MemorySpace.SMEM),   # taps
                    pl.BlockSpec((None, c, hw), lambda i: (i, 0, 0)),    # x
                ],
                out_specs=pl.BlockSpec((None, c, hw), lambda i: (i, 0, 0)),
            ),
            compiler_params=pltpu.CompilerParams(
                dimension_semantics=("parallel",),
                vmem_limit_bytes=vmem_limit,
            ),
        )(w_taps, x2)
        return out.reshape(b, c, h, w)

    # ---------------- fallback: two streaming passes -------------------------
    # Pass 1: pool (+ conv + sigmoid in the finalize).  2 live x buffers + f32 temp.
    pool_tile = _pick_hw_tile(hw, budget, c * (2 * itemsize + 4))
    n_pool = pl.cdiv(hw, pool_tile)
    pool_tail = hw % pool_tile

    att = pl.pallas_call(
        functools.partial(_pool_att_kernel, inv_hw=inv_hw, tail=pool_tail, k=k),
        out_shape=jax.ShapeDtypeStruct((b, c, 1), jnp.float32),
        grid_spec=pltpu.PrefetchScalarGridSpec(
            num_scalar_prefetch=0,
            grid=(b, n_pool),
            in_specs=[
                pl.BlockSpec(memory_space=pltpu.MemorySpace.SMEM),       # taps
                pl.BlockSpec((None, c, pool_tile), lambda i, t: (i, 0, t)),
            ],
            out_specs=pl.BlockSpec((None, c, 1), lambda i, t: (i, 0, 0)),
        ),
        compiler_params=pltpu.CompilerParams(
            dimension_semantics=("parallel", "arbitrary"),
            vmem_limit_bytes=vmem_limit,
        ),
    )(w_taps, x2)

    # Pass 2: scale.  4 live x-sized buffers (in + out, double-buffered).
    scale_tile = _pick_hw_tile(hw, budget, c * (4 * itemsize + 4))
    n_scale = pl.cdiv(hw, scale_tile)
    # TODO(synk): add channel tiling (with a 1-channel conv halo) for very
    # large C where the lane tile would collapse toward 128.
    out = pl.pallas_call(
        _scale_kernel,
        out_shape=jax.ShapeDtypeStruct((b, c, hw), x.dtype),
        grid_spec=pltpu.PrefetchScalarGridSpec(
            num_scalar_prefetch=0,
            grid=(b, n_scale),
            in_specs=[
                pl.BlockSpec((None, c, 1), lambda i, t: (i, 0, 0)),          # att
                pl.BlockSpec((None, c, scale_tile), lambda i, t: (i, 0, t)),  # x
            ],
            out_specs=pl.BlockSpec((None, c, scale_tile), lambda i, t: (i, 0, t)),
        ),
        compiler_params=pltpu.CompilerParams(
            dimension_semantics=("parallel", "parallel"),
            vmem_limit_bytes=vmem_limit,
        ),
    )(att, x2)
    return out.reshape(b, c, h, w)


# --------------------------------------------------------------------------- #
# Pure-JAX reference (matches the PyTorch module)
# --------------------------------------------------------------------------- #
def _eca_reference(x, w_taps):
    w_taps = jnp.asarray(w_taps, jnp.float32).reshape(-1)
    k = w_taps.shape[0]
    pad = (k - 1) // 2
    y = jnp.mean(x.astype(jnp.float32), axis=(2, 3))                # (B, C)
    yp = jnp.pad(y, ((0, 0), (pad, pad)))
    c = y.shape[1]
    conv = sum(w_taps[j] * yp[:, j:j + c] for j in range(k))
    att = jax.nn.sigmoid(conv)
    return (x * att[:, :, None, None].astype(x.dtype)).astype(x.dtype)


if __name__ == "__main__":
    key = jax.random.PRNGKey(0)
    kx, kw, kx2 = jax.random.split(key, 3)

    # Small shapes consistent with the module's forward (b, c, h, w).
    B, C, H, W = 2, 4, 16, 16
    x = jax.random.normal(kx, (B, C, H, W), dtype=jnp.float32)

    # Conv1d(1, 1, kernel_size=3, bias=False) weight in its native (1,1,3) shape.
    k_size = 3
    bound = 1.0 / (1.0 * k_size) ** 0.5
    conv_weight = jax.random.uniform(
        kw, (1, 1, k_size), minval=-bound, maxval=bound, dtype=jnp.float32)

    # 1) Fused single-pass path (default for these shapes).
    out = jax.block_until_ready(eca_forward(x, conv_weight))
    ref = _eca_reference(x, conv_weight)
    assert out.shape == x.shape
    assert jnp.allclose(out, ref, atol=1e-5, rtol=1e-5), "fused path mismatch"

    # 2) Force the two-pass fallback (tiny tiling budget) incl. ragged tail.
    x2 = jax.random.normal(kx2, (1, 8, 10, 20), dtype=jnp.float32)   # hw=200
    out2 = jax.block_until_ready(
        eca_forward(x2, conv_weight, tile_budget_bytes=8 * 1024))
    ref2 = _eca_reference(x2, conv_weight)
    assert jnp.allclose(out2, ref2, atol=1e-5, rtol=1e-5), "two-pass mismatch"

    print("KERNEL_OK")
</pallas_src>

<mosaic_0001>
module attributes {stable_mosaic.version = 11 : i64} {
  func.func @_fused_kernel(%arg0: i32, %arg1: memref<3xf32, #tpu.memory_space<smem>>, %arg2: memref<1x4x256xf32, #tpu.memory_space<vmem>>, %arg3: memref<1x4x256xf32, #tpu.memory_space<vmem>>) attributes {dimension_semantics = [#tpu.dimension_semantics<parallel>], iteration_bounds = array<i64: 2>, scalar_prefetch = 0 : i64, scratch_operands = 0 : i64, tpu.core_type = #tpu.core_type<tc>, window_params = [{transform_indices = @transform_0, window_bounds = array<i64: 3>}, {transform_indices = @transform_1, window_bounds = array<i64: 1, 4, 256>}, {transform_indices = @transform_2, window_bounds = array<i64: 1, 4, 256>}]} {
    %c0 = arith.constant 0 : index
    %c0_0 = arith.constant 0 : index
    %c0_1 = arith.constant 0 : index
    %0 = vector.load %arg2[%c0, %c0_0, %c0_1] : memref<1x4x256xf32, #tpu.memory_space<vmem>>, vector<1x4x256xf32>
    %1 = vector.shape_cast %0 : vector<1x4x256xf32> to vector<4x256xf32>
    %cst = arith.constant dense<0.000000e+00> : vector<4xf32>
    %2 = vector.multi_reduction <add>, %1, %cst [1] : vector<4x256xf32> to vector<4xf32>
    %3 = vector.shape_cast %2 : vector<4xf32> to vector<4x1xf32>
    %cst_2 = arith.constant 3.906250e-03 : f32
    %4 = vector.broadcast %cst_2 : f32 to vector<4x1xf32>
    %5 = arith.mulf %3, %4 : vector<4x1xf32>
    %6 = tpu.iota {dimensions = array<i32: 0>} : vector<4x1xi32>
    %cst_3 = arith.constant 0.000000e+00 : f32
    %7 = vector.broadcast %cst_3 : f32 to vector<4x1xf32>
    %c1_i32 = arith.constant 1 : i32
    %8 = tpu.dynamic_rotate %5 by %c1_i32 dim 0 : vector<4x1xf32>, i32 -> vector<4x1xf32>
    %c1_i32_4 = arith.constant 1 : i32
    %9 = vector.broadcast %c1_i32_4 : i32 to vector<4x1xi32>
    %10 = arith.cmpi sge, %6, %9 : vector<4x1xi32>
    %cst_5 = arith.constant 0.000000e+00 : f32
    %11 = vector.broadcast %cst_5 : f32 to vector<4x1xf32>
    %12 = arith.select %10, %8, %11 : vector<4x1xi1>, vector<4x1xf32>
    %c0_6 = arith.constant 0 : index
    %13 = memref.load %arg1[%c0_6] : memref<3xf32, #tpu.memory_space<smem>>
    %14 = vector.broadcast %13 : f32 to vector<4x1xf32>
    %15 = arith.mulf %14, %12 : vector<4x1xf32>
    %16 = arith.addf %7, %15 : vector<4x1xf32>
    %c1 = arith.constant 1 : index
    %17 = memref.load %arg1[%c1] : memref<3xf32, #tpu.memory_space<smem>>
    %18 = vector.broadcast %17 : f32 to vector<4x1xf32>
    %19 = arith.mulf %18, %5 : vector<4x1xf32>
    %20 = arith.addf %16, %19 : vector<4x1xf32>
    %c3_i32 = arith.constant 3 : i32
    %21 = tpu.dynamic_rotate %5 by %c3_i32 dim 0 : vector<4x1xf32>, i32 -> vector<4x1xf32>
    %c3_i32_7 = arith.constant 3 : i32
    %22 = vector.broadcast %c3_i32_7 : i32 to vector<4x1xi32>
    %23 = arith.cmpi slt, %6, %22 : vector<4x1xi32>
    %cst_8 = arith.constant 0.000000e+00 : f32
    %24 = vector.broadcast %cst_8 : f32 to vector<4x1xf32>
    %25 = arith.select %23, %21, %24 : vector<4x1xi1>, vector<4x1xf32>
    %c2 = arith.constant 2 : index
    %26 = memref.load %arg1[%c2] : memref<3xf32, #tpu.memory_space<smem>>
    %27 = vector.broadcast %26 : f32 to vector<4x1xf32>
    %28 = arith.mulf %27, %25 : vector<4x1xf32>
    %29 = arith.addf %20, %28 : vector<4x1xf32>
    %30 = arith.negf %29 : vector<4x1xf32>
    %31 = math.exp %30 : vector<4x1xf32>
    %cst_9 = arith.constant 1.000000e+00 : f32
    %32 = vector.broadcast %cst_9 : f32 to vector<4x1xf32>
    %33 = arith.addf %32, %31 : vector<4x1xf32>
    %34 = arith.divf %32, %33 : vector<4x1xf32>
    %c0_10 = arith.constant 0 : index
    %c0_11 = arith.constant 0 : index
    %c0_12 = arith.constant 0 : index
    %35 = vector.load %arg2[%c0_10, %c0_11, %c0_12] : memref<1x4x256xf32, #tpu.memory_space<vmem>>, vector<1x4x256xf32>
    %36 = vector.shape_cast %35 : vector<1x4x256xf32> to vector<4x256xf32>
    %37 = vector.broadcast %34 : vector<4x1xf32> to vector<4x256xf32>
    %38 = arith.mulf %36, %37 : vector<4x256xf32>
    %c0_13 = arith.constant 0 : index
    %c0_14 = arith.constant 0 : index
    %c0_15 = arith.constant 0 : index
    %39 = vector.load %arg3[%c0_13, %c0_14, %c0_15] : memref<1x4x256xf32, #tpu.memory_space<vmem>>, vector<1x4x256xf32>
    %40 = vector.shape_cast %39 : vector<1x4x256xf32> to vector<4x256xf32>
    %41 = vector.shape_cast %38 : vector<4x256xf32> to vector<1x4x256xf32>
    tpu.vector_store %arg3[%c0_13, %c0_14, %c0_15], %41 {strides = array<i32>} : memref<1x4x256xf32, #tpu.memory_space<vmem>>, vector<1x4x256xf32>,
    return
  }
  func.func @transform_0(%arg0: i32) -> i32 {
    %c0_i32 = arith.constant 0 : i32
    %c0_i32_0 = arith.constant 0 : i32
    return %c0_i32 : i32
  }
  func.func @transform_1(%arg0: i32) -> (i32, i32, i32) {
    %c0_i32 = arith.constant 0 : i32
    %c0_i32_0 = arith.constant 0 : i32
    %c0_i32_1 = arith.constant 0 : i32
    return %arg0, %c0_i32, %c0_i32_0 : i32, i32, i32
  }
  func.func @transform_2(%arg0: i32) -> (i32, i32, i32) {
    %c0_i32 = arith.constant 0 : i32
    %c0_i32_0 = arith.constant 0 : i32
    %c0_i32_1 = arith.constant 0 : i32
    return %arg0, %c0_i32, %c0_i32_0 : i32, i32, i32
  }
}

</mosaic_0001>

<llo_original>
// kernel: tpu_custom_call.1
$region0: #{tpu_custom_call.1}
  #allocation0 [shape = 'u32[]', space=smem, size = 0x4, offset = 0x4, fixed_abs, tag = 'smem constant byte address 0x4 - core index']
  #allocation1 [shape = 'u32[144,128]{1,0:T(1,128)}', space=vmem, size = 0x12000, scoped, tag = 'internal scratch']
  %s0 = inlined_call_operand.hbm [shape: f32[3], index: 0, kind: input, shape index: {}]
  %s1 = inlined_call_operand.hbm [shape: f32[2,4,256], index: 1, kind: input, shape index: {}]
  %s2 = inlined_call_operand.hbm [shape: f32[2,4,256], index: 2, kind: output, shape index: {}]
  %s3 = sld [smem:[#allocation0]]
  $region49: #{tpu_custom_call.1} parent=0
    _
  %s5 = ssub.s32 1, %s3
  %s6 = scalar_select 0, %s5, %s3
  $region1: #{tpu_custom_call.1} parent=0
    #allocation2 [shape = 'u8[512]{0}', space=smem, size = 0x200, scoped, tag = 'input window, operand 0, single buffered']
    #allocation3 [shape = 's32[2]{0}', space=sflag, size = 0x8, scoped, tag = 'scoped memory for tpu_custom_call.1']
    #allocation4 [shape = 's32[2]{0}', space=sflag, size = 0x8, scoped, tag = 'scoped memory for tpu_custom_call.1']
    #allocation5 [shape = 's32[2]{0}', space=sflag, size = 0x8, scoped, tag = 'scoped memory for tpu_custom_call.1']
    #allocation6 [shape = 'u8[8192]{0}', space=vmem, size = 0x2000, scoped, tag = 'input window, operand 1']
    #allocation7 [shape = 'u8[8192]{0}', space=vmem, size = 0x2000, scoped, tag = 'output window, operand 0']
    %7 = vsyncpa [#allocation5], 0
    %8 = vsyncpa [#allocation3], 0
    %s9 = scalar_lea.sflag [#allocation3], 1
    %10 = vsyncpa %s9, 0
    %11 = vsyncpa [#allocation4], 0
    %s12 = scalar_lea.sflag [#allocation4], 1
    %13 = vsyncpa %s12, 0
    loop: start=0, step=1, limit=4
    $region2: #{tpu_custom_call.1} parent=1 // loop_pre_header
      _
    $region3: #{tpu_custom_call.1} parent=1 // loop_header
      %s15 = sphi 0, %s19
      %p16 = scmp.ge.s32.totalorder %s15, 4
      %s23 = sphi 0, %s23
      %s25 = sphi 0, %s23
      %s26 = sphi 0, %s25
      %s40 = sphi 0, %s26
      %s46 = sphi 0, %s48
      %s49 = sphi 0, %s46
      %s50 = sphi 0, %s49
      %s66 = sphi 0, %s50
      %s72 = sphi 0, %s74
      %s75 = sphi 0, %s72
      %s76 = sphi 0, %s75
      %s92 = sphi 0, %s76
    $region4: #{tpu_custom_call.1} parent=1 // loop_header_branch
      %18 = sbr.rel (%p16) target = $region8
    $region5: #{tpu_custom_call.1} parent=1 // loop_body
      %s20 = ssub.s32 %s15, 1
      %s21 = ssub.s32 %s15, 2
      %s22 = sadd.s32 %s15, 1
      %s24 = sadd.s32 %s23, 1
      %p27 = scmp.eq.s32.totalorder %s15, 1
      %p28 = scmp.ne.s32.totalorder %s23, %s25
      %p29 = scmp.eq.s32.totalorder %s15, 0
      %p30 = por %p28, %p29
      %p31 = scmp.ne.s32.totalorder %s23, %s25
      %p32 = scmp.eq.s32.totalorder %s20, 1
      %p33 = por %p31, %p32
      %p34 = scmp.ne.s32.totalorder %s25, %s26
      %p35 = scmp.eq.s32.totalorder %s20, 0
      %p36 = por %p34, %p35
      %p37 = scmp.ne.s32.totalorder %s25, %s26
      %p38 = scmp.eq.s32.totalorder %s21, 1
      %p39 = por %p37, %p38
      %p41 = scmp.ne.s32.totalorder %s26, %s40
      %p42 = scmp.eq.s32.totalorder %s21, 0
      %p43 = por %p41, %p42
      %s44 = ssub.s32 %s15, %s22
      %p45 = scmp.eq.s32.totalorder %s44, 0
      %s47 = sadd.s32 %s46, 1
      %s48 = scalar_select %p45, %s46, %s47
      %p51 = pneg %p45
      %p52 = scmp.eq.s32.totalorder %s15, 1
      %p53 = por %p51, %p52
      %p54 = scmp.ne.s32.totalorder %s46, %s49
      %p55 = scmp.eq.s32.totalorder %s15, 0
      %p56 = por %p54, %p55
      %p57 = scmp.ne.s32.totalorder %s46, %s49
      %p58 = scmp.eq.s32.totalorder %s20, 1
      %p59 = por %p57, %p58
      %p60 = scmp.ne.s32.totalorder %s49, %s50
      %p61 = scmp.eq.s32.totalorder %s20, 0
      %p62 = por %p60, %p61
      %p63 = scmp.ne.s32.totalorder %s49, %s50
      %p64 = scmp.eq.s32.totalorder %s21, 1
      %p65 = por %p63, %p64
      %p67 = scmp.ne.s32.totalorder %s50, %s66
      %p68 = scmp.eq.s32.totalorder %s21, 0
      %p69 = por %p67, %p68
      %s70 = ssub.s32 %s15, %s22
      %p71 = scmp.eq.s32.totalorder %s70, 0
      %s73 = sadd.s32 %s72, 1
      %s74 = scalar_select %p71, %s72, %s73
      %p77 = pneg %p71
      %p78 = scmp.eq.s32.totalorder %s15, 1
      %p79 = por %p77, %p78
      %p80 = scmp.ne.s32.totalorder %s72, %s75
      %p81 = scmp.eq.s32.totalorder %s15, 0
      %p82 = por %p80, %p81
      %p83 = scmp.ne.s32.totalorder %s72, %s75
      %p84 = scmp.eq.s32.totalorder %s20, 1
      %p85 = por %p83, %p84
      %p86 = scmp.ne.s32.totalorder %s75, %s76
      %p87 = scmp.eq.s32.totalorder %s20, 0
      %p88 = por %p86, %p87
      %p89 = scmp.ne.s32.totalorder %s75, %s76
      %p90 = scmp.eq.s32.totalorder %s21, 1
      %p91 = por %p89, %p90
      %p93 = scmp.ne.s32.totalorder %s76, %s92
      %p94 = scmp.eq.s32.totalorder %s21, 0
      %p95 = por %p93, %p94
      %p96 = scmp.le.s32.totalorder 1, %s15
      %p97 = scmp.lt.s32.totalorder %s15, 3
      %p98 = pnand %p96, %p97
      %p99 = pneg %p98
      // Predicated region
      $region9: #{tpu_custom_call.1} parent=5 // pred_check
        _
      $region10: #{tpu_custom_call.1} parent=5 // pred_check_branch
        %101 = sbr.rel (%p98) target = $region12
      $region11: #{tpu_custom_call.1} parent=5 // pred_region
        %s102 = ssub.s32 %s15, 1
        // Predicated region
        $region13: #{tpu_custom_call.1} parent=11 // pred_check
          %p103 = pneg %p36
        $region14: #{tpu_custom_call.1} parent=11 // pred_check_branch
          %105 = sbr.rel (%p103) target = $region16
        $region15: #{tpu_custom_call.1} parent=11 // pred_region
          %s107 = ssub.s32 16, 16
          %108 = vsyncadd [#allocation5], %s107
          %111 = dma.hbm_to_smem %s0, 16, [#allocation2], [#allocation5]
        $region16: #{tpu_custom_call.1} parent=11 // pred_fallthru
          _
      $region12: #{tpu_custom_call.1} parent=5 // pred_fallthru
        _
      %p112 = scmp.lt.s32.totalorder %s15, 2
      // Predicated region
      $region17: #{tpu_custom_call.1} parent=5 // pred_check
        %p113 = pneg %p112
      $region18: #{tpu_custom_call.1} parent=5 // pred_check_branch
        %115 = sbr.rel (%p113) target = $region20
      $region19: #{tpu_custom_call.1} parent=5 // pred_region
        // Predicated region
        $region21: #{tpu_custom_call.1} parent=19 // pred_check
          %p116 = pneg %p56
        $region22: #{tpu_custom_call.1} parent=19 // pred_check_branch
          %118 = sbr.rel (%p116) target = $region24
        $region23: #{tpu_custom_call.1} parent=19 // pred_region
          %s119 = sand.u32 %s46, 1
          %s120 = scalar_lea.sflag [#allocation3], %s119
          %s121 = sand.u32 %s46, 1
          %s122 = smul.addr %s121, 8
          %s123 = scalar_lea.vmem [#allocation6], %s122
          %s125 = ssub.s32 128, 128
          %126 = vsyncadd %s120, %s125
          %s127 = smul.addr %s15, 2
          %s128 = smul.addr %s127, 64
          %s129 = scalar_lea.hbm %s1, %s128
          %s131 = sshll.u32 %s123, 4
          %s132 = int_to_ptr.vmem [resolvable:$true] %s131
          %134 = dma.hbm_to_vmem [thread:$0]  %s129, 128, %s132, %s120
        $region24: #{tpu_custom_call.1} parent=19 // pred_fallthru
          _
      $region20: #{tpu_custom_call.1} parent=5 // pred_fallthru
        _
      %p135 = scmp.le.s32.totalorder 1, %s15
      %p136 = scmp.lt.s32.totalorder %s15, 3
      %p137 = pnand %p135, %p136
      %p138 = pneg %p137
      // Predicated region
      $region25: #{tpu_custom_call.1} parent=5 // pred_check
        _
      $region26: #{tpu_custom_call.1} parent=5 // pred_check_branch
        %140 = sbr.rel (%p137) target = $region28
      $region27: #{tpu_custom_call.1} parent=5 // pred_region
        %s141 = ssub.s32 %s15, 1
        // Predicated region
        $region29: #{tpu_custom_call.1} parent=27 // pred_check
          %p142 = pneg %p36
        $region30: #{tpu_custom_call.1} parent=27 // pred_check_branch
          %144 = sbr.rel (%p142) target = $region32
        $region31: #{tpu_custom_call.1} parent=27 // pred_region
          %145 = dma.done [#allocation5], 16
        $region32: #{tpu_custom_call.1} parent=27 // pred_fallthru
          _
        %s146 = sand.u32 %s49, 1
        %s147 = scalar_lea.sflag [#allocation3], %s146
        %s148 = sand.u32 %s49, 1
        %s149 = smul.addr %s148, 8
        %s150 = scalar_lea.vmem [#allocation6], %s149
        // Predicated region
        $region33: #{tpu_custom_call.1} parent=27 // pred_check
          %p151 = pneg %p62
        $region34: #{tpu_custom_call.1} parent=27 // pred_check_branch
          %153 = sbr.rel (%p151) target = $region36
        $region35: #{tpu_custom_call.1} parent=27 // pred_region
          %154 = dma.done %s147, 128
        $region36: #{tpu_custom_call.1} parent=27 // pred_fallthru
          _
        %155 = sfence
        %p156 = pneg %p36
        %p157 = pneg %p33
        %s158 = sand.u32 %s49, 1
        %s159 = scalar_lea.sflag [#allocation3], %s158
        %s160 = sand.u32 %s49, 1
        %s161 = smul.addr %s160, 8
        %s162 = scalar_lea.vmem [#allocation6], %s161
        %p163 = pneg %p62
        %p164 = pneg %p59
        %p165 = pneg %p88
        %p166 = pneg %p85
        %s167 = sand.u32 %s75, 1
        %s168 = scalar_lea.sflag [#allocation4], %s167
        %s169 = sand.u32 %s75, 1
        %s170 = smul.addr %s169, 8
        %s171 = scalar_lea.vmem [#allocation7], %s170
        %v172 = vld [vmem:[%s150] sm:$0xff]
        %v174 = vcombine.high %v172, %v172
        %vm176 = vcmask 1043456
        %v177 = vsel %vm176, %v172, 0.0
        %v178 = vsel %vm176, %v174, 0.0
        %v179 = vadd.f32 %v177, %v178
        %180 = vadd.xlane.f32.xlu0 %v179
        %v181 = vpop.xlane.xlu0 %180
        %v182 = vmul.f32 %v181, 0.00390625
        %v183 = vlaneseq
        %v184 = vshrl.u32 %v183, 7
        %vm185 = vcmask 1047556
        %v186 = vrot.slane %v182, 4
        %v187 = vsel %vm185, %v186, %v182
        %v188 = vrot.slane %v187, 4
        %v189 = vsel %vm185, %v188, %v182
        %vm190 = vcmp.ge.s32.totalorder %v184, 1
        %v192 = vrot.slane %v189, 3
        %v194 = vsel %vm190, %v192, 0.0
        %s195 = sld [smem:[#allocation2]]
        %v196 = vstv %s195
        %v197 = vmul.f32 %v196, %v194
        %v198 = vadd.f32 %v197, 0.0
        %s199 = sld [smem:[#allocation2 + $0x1]]
        %v200 = vstv %s199
        %v201 = vmul.f32 %v200, %v182
        %v202 = vadd.f32 %v198, %v201
        %vm203 = vcmp.lt.s32.totalorder %v184, 3
        %v204 = vrot.slane %v189, 1
        %v206 = vsel %vm203, %v204, 0.0
        %s207 = sld [smem:[#allocation2 + $0x2]]
        %v208 = vstv %s207
        %v209 = vmul.f32 %v208, %v206
        %v210 = vadd.f32 %v202, %v209
        %v211 = vxor.u32 %v210, 2147483648
        %v212 = vmul.f32 %v211, 1.442695
        %v213 = vpow.pop %v212
        %v214 = vadd.f32 %v213, 1.0
        %v215 = vrcp.pop %v214
        %v216 = vmul.f32 1.0, %v215
        %218 = vset.pattern.permute.xlu0 0
        %219 = vperm.xlu0 %218, %v216
        %v220 = vpop.permute.xlu0 %219
        %v222 = vunpack.c.l.s4 839922192
        %v223 = vunpack.c.0.s8 %v222
        %v224 = vlaneseq
        %v225 = vshrl.u32 %v224, 7
        %v226 = vsub.s32 %v223, %v225
        %v227 = vrot.slane %v220, %v226
        %v229 = vmul.f32 %v172, %v227
        %230 = vst [vmem:[%s171] sm:$0xff] %v229
        %s231 = sand.u32 %s75, 1
        %s232 = scalar_lea.sflag [#allocation4], %s231
        %s233 = sand.u32 %s75, 1
        %s234 = smul.addr %s233, 8
        %s235 = scalar_lea.vmem [#allocation7], %s234
        // Predicated region
        $region37: #{tpu_custom_call.1} parent=27 // pred_check
          %p236 = pneg %p85
        $region38: #{tpu_custom_call.1} parent=27 // pred_check_branch
          %238 = sbr.rel (%p236) target = $region40
        $region39: #{tpu_custom_call.1} parent=27 // pred_region
          %s240 = ssub.s32 128, 128
          %241 = vsyncadd %s232, %s240
          %s242 = smul.addr %s20, 2
          %s243 = smul.addr %s242, 64
          %s244 = scalar_lea.hbm %s2, %s243
          %s246 = sshll.u32 %s235, 4
          %s247 = int_to_ptr.vmem [resolvable:$true] %s246
          %249 = dma.vmem_to_hbm [thread:$0]  %s247, 128, %s244, %s232
        $region40: #{tpu_custom_call.1} parent=27 // pred_fallthru
          _
      $region28: #{tpu_custom_call.1} parent=5 // pred_fallthru
        _
      %p250 = scmp.le.s32.totalorder 2, %s15
      // Predicated region
      $region41: #{tpu_custom_call.1} parent=5 // pred_check
        %p251 = pneg %p250
      $region42: #{tpu_custom_call.1} parent=5 // pred_check_branch
        %253 = sbr.rel (%p251) target = $region44
      $region43: #{tpu_custom_call.1} parent=5 // pred_region
        %s254 = ssub.s32 %s15, 2
        // Predicated region
        $region45: #{tpu_custom_call.1} parent=43 // pred_check
          %p255 = pneg %p91
        $region46: #{tpu_custom_call.1} parent=43 // pred_check_branch
          %257 = sbr.rel (%p255) target = $region48
        $region47: #{tpu_custom_call.1} parent=43 // pred_region
          %s258 = sand.u32 %s76, 1
          %s259 = scalar_lea.sflag [#allocation4], %s258
          %s260 = sand.u32 %s76, 1
          %s261 = smul.addr %s260, 8
          %s262 = scalar_lea.vmem [#allocation7], %s261
          %263 = dma.done %s259, 128
        $region48: #{tpu_custom_call.1} parent=43 // pred_fallthru
          _
      $region44: #{tpu_custom_call.1} parent=5 // pred_fallthru
        _
    $region6: #{tpu_custom_call.1} parent=1 // loop_footer
      %s19 = sadd.s32 1, %s15
    $region7: #{tpu_custom_call.1} parent=1 // loop_footer_branch
      %14 = sbr.rel target = $region3
    $region8: #{tpu_custom_call.1} parent=1 // loop_exit
      _
    %264 = vsyncpa [#allocation3], 1
    %s265 = scalar_lea.sflag [#allocation3], 1
    %266 = vsyncpa %s265, 1
    %267 = vsyncpa [#allocation4], 1
    %s268 = scalar_lea.sflag [#allocation4], 1
    %269 = vsyncpa %s268, 1
    %270 = vsyncpa [#allocation5], 1
    %s271 = scalar_lea.sflag [#allocation5], 1
    %272 = vsyncpa %s271, 1

</llo_original>
